<compile_context>
chip_gen: v5e
topology: v5e:2x2
jax: 0.10.0
libtpu: 0.0.40
codegen_flags: <defaults>
</compile_context>

<pallas_src>
import jax
import jax.numpy as jnp
from jax.experimental import pallas as pl
from jax.experimental.pallas import tpu as pltpu


def _round_up(x, m):
    return ((x + m - 1) // m) * m


def _pick_tile(total, desired):
    """Largest multiple of 128 that divides `total` (a 128-multiple) and is <= desired."""
    units = total // 128
    want = max(1, min(desired // 128, units))
    for d in range(want, 0, -1):
        if units % d == 0:
            return d * 128
    return 128


def _vmem_limit_bytes():
    cap = 0
    try:
        info = pltpu.get_tpu_info()
        cap = int(getattr(info, "vmem_capacity_bytes", 0) or 0)
    except Exception:
        cap = 0
    if cap >= 128 * 1024 * 1024:        # v5e / v6e: 128 MiB physical VMEM
        return 100 * 1024 * 1024
    return 48 * 1024 * 1024             # v7x (64 MiB) or unknown: conservative


# --------------- stage 1: feature transform (row x F_out tiles) -------------

def _feature_kernel(mean_ref, var_ref, wm_ref, bm_ref, wv_ref, bv_ref,
                    m_out_ref, v_out_ref):
    m = jnp.dot(mean_ref[...], wm_ref[...],
                preferred_element_type=jnp.float32) + bm_ref[...]
    v = jnp.dot(var_ref[...], wv_ref[...],
                preferred_element_type=jnp.float32) + bv_ref[...]
    m = jnp.where(m > 0, m, jnp.exp(m) - 1.0)    # ELU(alpha=1)
    v = jnp.maximum(v, 0.0)                       # ReLU
    att = jnp.exp(-v)
    m_out_ref[...] = (m * att).astype(m_out_ref.dtype)
    v_out_ref[...] = (v * att * att).astype(v_out_ref.dtype)


def _feature_kernel_initial(mean_ref, wm_ref, bm_ref, m_out_ref, v_out_ref):
    m = jnp.dot(mean_ref[...], wm_ref[...],
                preferred_element_type=jnp.float32) + bm_ref[...]
    v = m                                         # var = pre-activation mean
    m = jnp.where(m > 0, m, jnp.exp(m) - 1.0)
    v = jnp.maximum(v, 0.0)
    att = jnp.exp(-v)
    m_out_ref[...] = (m * att).astype(m_out_ref.dtype)
    v_out_ref[...] = (v * att * att).astype(v_out_ref.dtype)


# --------------- stage 2: adjacency propagation (tiled matmuls) -------------

def _make_propagate_resident_kernel(tk):
    """m_h / v_h are VMEM-resident (constant index_map); slice with pl.ds."""
    def kernel(adj0_ref, adj1_ref, m_ref, v_ref, mean_out_ref, var_out_ref):
        k = pl.program_id(1)

        @pl.when(k == 0)
        def _():
            mean_out_ref[...] = jnp.zeros_like(mean_out_ref)
            var_out_ref[...] = jnp.zeros_like(var_out_ref)

        off = pl.multiple_of(k * tk, 128)
        mean_out_ref[...] += jnp.dot(adj0_ref[...], m_ref[pl.ds(off, tk), :],
                                     preferred_element_type=jnp.float32)
        var_out_ref[...] += jnp.dot(adj1_ref[...], v_ref[pl.ds(off, tk), :],
                                    preferred_element_type=jnp.float32)
    return kernel


def _propagate_streamed_kernel(adj0_ref, adj1_ref, m_ref, v_ref,
                               mean_out_ref, var_out_ref):
    k = pl.program_id(1)

    @pl.when(k == 0)
    def _():
        mean_out_ref[...] = jnp.zeros_like(mean_out_ref)
        var_out_ref[...] = jnp.zeros_like(var_out_ref)

    mean_out_ref[...] += jnp.dot(adj0_ref[...], m_ref[...],
                                 preferred_element_type=jnp.float32)
    var_out_ref[...] += jnp.dot(adj1_ref[...], v_ref[...],
                                preferred_element_type=jnp.float32)


# ----------------------------- wrapper ---------------------------------------

def robust_gcn_conv(mean, var, wm, bm, wv, bv, adj0, adj1, *,
                    initial=False, propagate_dtype=jnp.bfloat16,
                    adj_row_tile=512, adj_k_tile=512, feat_row_tile=1024):
    """mean/var: [N, F_in]; wm/wv: [F_in, F_out] (pre-transposed nn.Linear
    weights); bm/bv: [1, F_out]; adj0/adj1: [N, N] dense (stand-in for torch
    sparse).  Returns (mean_out, var_out): [N, F_out] float32 each."""
    N, F_in = mean.shape
    F_out = wm.shape[1]
    op_dtype = jnp.dtype(propagate_dtype)
    op_bytes = op_dtype.itemsize
    vmem_limit = _vmem_limit_bytes()

    F_in_pad = _round_up(F_in, 128)
    F_out_pad = _round_up(F_out, 128)
    n_pad = _round_up(N, 128)

    tm = _pick_tile(n_pad, adj_row_tile)     # stage-2 output-row tile
    tk = _pick_tile(n_pad, adj_k_tile)       # stage-2 contraction tile
    ft = _pick_tile(n_pad, feat_row_tile)    # stage-1 row tile

    # Stage-1 F_out tiling guard: keep the two resident weight blocks under a
    # small VMEM budget (matters for very large F_in/F_out on v7x).
    weight_budget = min(8 * 1024 * 1024, vmem_limit // 4)
    fo = 128
    units = F_out_pad // 128
    for d in range(units, 0, -1):
        if units % d == 0 and 2 * 2 * F_in_pad * (d * 128) * op_bytes <= weight_budget:
            fo = d * 128
            break

    def pad_to(x, rows, cols, dtype):
        x = x.astype(dtype)                  # cast first (no padded f32 temp)
        pr, pc = rows - x.shape[0], cols - x.shape[1]
        if pr or pc:
            x = jnp.pad(x, ((0, pr), (0, pc)))
        return x

    # Matmul operands in propagate_dtype (bf16 fast path); biases stay f32.
    mean_p = pad_to(mean, n_pad, F_in_pad, op_dtype)
    wm_p = pad_to(wm, F_in_pad, F_out_pad, op_dtype)
    bm_p = pad_to(bm.reshape(1, -1), 1, F_out_pad, jnp.float32)

    # ---- stage 1: feature transform, grid over (row tiles, F_out tiles) ----
    row_in_spec = pl.BlockSpec((ft, F_in_pad), lambda i, j: (i, 0))
    weight_spec = pl.BlockSpec((F_in_pad, fo), lambda i, j: (0, j))
    bias_spec = pl.BlockSpec((1, fo), lambda i, j: (0, j))
    row_out_spec = pl.BlockSpec((ft, fo), lambda i, j: (i, j))

    feat_grid = (n_pad // ft, F_out_pad // fo)
    feat_out_shape = (jax.ShapeDtypeStruct((n_pad, F_out_pad), op_dtype),
                      jax.ShapeDtypeStruct((n_pad, F_out_pad), op_dtype))
    feat_params = pltpu.CompilerParams(
        dimension_semantics=("parallel", "parallel"),
        vmem_limit_bytes=vmem_limit)

    if initial:
        m_h, v_h = pl.pallas_call(
            _feature_kernel_initial,
            out_shape=feat_out_shape,
            grid_spec=pltpu.PrefetchScalarGridSpec(
                num_scalar_prefetch=0,
                grid=feat_grid,
                in_specs=[row_in_spec, weight_spec, bias_spec],
                out_specs=[row_out_spec, row_out_spec]),
            compiler_params=feat_params,
        )(mean_p, wm_p, bm_p)
    else:
        var_p = pad_to(var, n_pad, F_in_pad, op_dtype)
        wv_p = pad_to(wv, F_in_pad, F_out_pad, op_dtype)
        bv_p = pad_to(bv.reshape(1, -1), 1, F_out_pad, jnp.float32)
        m_h, v_h = pl.pallas_call(
            _feature_kernel,
            out_shape=feat_out_shape,
            grid_spec=pltpu.PrefetchScalarGridSpec(
                num_scalar_prefetch=0,
                grid=feat_grid,
                in_specs=[row_in_spec, row_in_spec, weight_spec, bias_spec,
                          weight_spec, bias_spec],
                out_specs=[row_out_spec, row_out_spec]),
            compiler_params=feat_params,
        )(mean_p, var_p, wm_p, bm_p, wv_p, bv_p)

    # ---- stage 2: tiled propagation adj0 @ m_h, adj1 @ v_h ------------------
    adj0_p = pad_to(adj0, n_pad, n_pad, op_dtype)   # cast before any padding
    adj1_p = pad_to(adj1, n_pad, n_pad, op_dtype)

    adj_spec = pl.BlockSpec((tm, tk), lambda i, k: (i, k))
    out_spec = pl.BlockSpec((tm, F_out_pad), lambda i, k: (i, 0))

    src_resident_bytes = 2 * n_pad * F_out_pad * op_bytes
    resident = src_resident_bytes <= min(16 * 1024 * 1024, vmem_limit // 3)

    if resident:
        prop_kernel = _make_propagate_resident_kernel(tk)
        src_spec = pl.BlockSpec((n_pad, F_out_pad), lambda i, k: (0, 0))
    else:
        prop_kernel = _propagate_streamed_kernel
        src_spec = pl.BlockSpec((tk, F_out_pad), lambda i, k: (k, 0))

    mean_o, var_o = pl.pallas_call(
        prop_kernel,
        out_shape=(jax.ShapeDtypeStruct((n_pad, F_out_pad), jnp.float32),
                   jax.ShapeDtypeStruct((n_pad, F_out_pad), jnp.float32)),
        grid_spec=pltpu.PrefetchScalarGridSpec(
            num_scalar_prefetch=0,
            grid=(n_pad // tm, n_pad // tk),
            in_specs=[adj_spec, adj_spec, src_spec, src_spec],
            out_specs=[out_spec, out_spec]),
        compiler_params=pltpu.CompilerParams(
            dimension_semantics=("parallel", "arbitrary"),
            vmem_limit_bytes=vmem_limit),
    )(adj0_p, adj1_p, m_h, v_h)

    return mean_o[:N, :F_out], var_o[:N, :F_out]


# ----------------------------- reference -------------------------------------

def _reference(mean, var, wm, bm, wv, bv, adj0, adj1, *, initial=False):
    m = mean @ wm + bm
    v = m if initial else var @ wv + bv
    m = jnp.where(m > 0, m, jnp.exp(m) - 1.0)
    v = jnp.maximum(v, 0.0)
    att = jnp.exp(-v)
    m = m * att
    v = v * att * att
    return adj0 @ m, adj1 @ v


if __name__ == "__main__":
    key = jax.random.PRNGKey(0)
    N, F_in, F_out = 16, 32, 32

    ks = jax.random.split(key, 8)
    mean = jax.random.normal(ks[0], (N, F_in), dtype=jnp.float32)
    var = jax.random.normal(ks[1], (N, F_in), dtype=jnp.float32)

    # nn.Linear-style init: U(-1/sqrt(fan_in), 1/sqrt(fan_in)); weights stored
    # pre-transposed as [F_in, F_out].
    bound = 1.0 / (F_in ** 0.5)
    wm = jax.random.uniform(ks[2], (F_in, F_out), jnp.float32, -bound, bound)
    bm = jax.random.uniform(ks[3], (1, F_out), jnp.float32, -bound, bound)
    wv = jax.random.uniform(ks[4], (F_in, F_out), jnp.float32, -bound, bound)
    bv = jax.random.uniform(ks[5], (1, F_out), jnp.float32, -bound, bound)

    # Dense row-normalized adjacency matrices (stand-in for torch sparse adj).
    a0 = jax.random.uniform(ks[6], (N, N), jnp.float32) < 0.3
    a1 = jax.random.uniform(ks[7], (N, N), jnp.float32) < 0.3
    eye = jnp.eye(N, dtype=jnp.float32)
    adj0 = a0.astype(jnp.float32) + eye
    adj1 = a1.astype(jnp.float32) + eye
    adj0 = adj0 / jnp.sum(adj0, axis=1, keepdims=True)
    adj1 = adj1 / jnp.sum(adj1, axis=1, keepdims=True)

    for initial in (False, True):
        ref_m, ref_v = _reference(mean, var, wm, bm, wv, bv, adj0, adj1,
                                  initial=initial)
        v_in = None if initial else var
        wv_in = None if initial else wv
        bv_in = None if initial else bv

        # Exact path: f32 operands everywhere.
        m_f, v_f = robust_gcn_conv(mean, v_in, wm, bm, wv_in, bv_in,
                                   adj0, adj1, initial=initial,
                                   propagate_dtype=jnp.float32)
        jax.block_until_ready((m_f, v_f))
        assert jnp.allclose(m_f, ref_m, atol=1e-5, rtol=1e-5)
        assert jnp.allclose(v_f, ref_v, atol=1e-5, rtol=1e-5)

        # Fast path: bf16 matmul operands (MXU-native) with f32 accumulation.
        m_b, v_b = robust_gcn_conv(mean, v_in, wm, bm, wv_in, bv_in,
                                   adj0, adj1, initial=initial,
                                   propagate_dtype=jnp.bfloat16)
        jax.block_until_ready((m_b, v_b))
        assert jnp.allclose(m_b, ref_m, atol=3e-2, rtol=3e-2)
        assert jnp.allclose(v_b, ref_v, atol=3e-2, rtol=3e-2)

    print("KERNEL_OK")
</pallas_src>

<mosaic_0001>
module attributes {stable_mosaic.version = 11 : i64} {
  func.func @_feature_kernel(%arg0: i32, %arg1: i32, %arg2: memref<128x128xf32, #tpu.memory_space<vmem>>, %arg3: memref<128x128xf32, #tpu.memory_space<vmem>>, %arg4: memref<128x128xf32, #tpu.memory_space<vmem>>, %arg5: memref<1x128xf32, #tpu.memory_space<vmem>>, %arg6: memref<128x128xf32, #tpu.memory_space<vmem>>, %arg7: memref<1x128xf32, #tpu.memory_space<vmem>>, %arg8: memref<128x128xf32, #tpu.memory_space<vmem>>, %arg9: memref<128x128xf32, #tpu.memory_space<vmem>>) attributes {dimension_semantics = [#tpu.dimension_semantics<parallel>, #tpu.dimension_semantics<parallel>], iteration_bounds = array<i64: 1, 1>, scalar_prefetch = 0 : i64, scratch_operands = 0 : i64, tpu.core_type = #tpu.core_type<tc>, window_params = [{transform_indices = @transform_0, window_bounds = array<i64: 128, 128>}, {transform_indices = @transform_1, window_bounds = array<i64: 128, 128>}, {transform_indices = @transform_2, window_bounds = array<i64: 128, 128>}, {transform_indices = @transform_3, window_bounds = array<i64: 1, 128>}, {transform_indices = @transform_4, window_bounds = array<i64: 128, 128>}, {transform_indices = @transform_5, window_bounds = array<i64: 1, 128>}, {transform_indices = @transform_6, window_bounds = array<i64: 128, 128>}, {transform_indices = @transform_7, window_bounds = array<i64: 128, 128>}]} {
    %c0 = arith.constant 0 : index
    %c0_0 = arith.constant 0 : index
    %0 = vector.load %arg2[%c0, %c0_0] : memref<128x128xf32, #tpu.memory_space<vmem>>, vector<128x128xf32>
    %c0_1 = arith.constant 0 : index
    %c0_2 = arith.constant 0 : index
    %1 = vector.load %arg4[%c0_1, %c0_2] : memref<128x128xf32, #tpu.memory_space<vmem>>, vector<128x128xf32>
    %cst = arith.constant dense<0.000000e+00> : vector<128x128xf32>
    %2 = tpu.matmul %0, %1, %cst {dimension_numbers = #tpu.dot_dimension_numbers<[1], [0], [0], [1], [0, 0, 1, 1], [], []>} : vector<128x128xf32>, vector<128x128xf32>, vector<128x128xf32> -> vector<128x128xf32>
    %c0_3 = arith.constant 0 : index
    %c0_4 = arith.constant 0 : index
    %3 = vector.load %arg5[%c0_3, %c0_4] : memref<1x128xf32, #tpu.memory_space<vmem>>, vector<1x128xf32>
    %4 = vector.broadcast %3 : vector<1x128xf32> to vector<128x128xf32>
    %5 = arith.addf %2, %4 : vector<128x128xf32>
    %c0_5 = arith.constant 0 : index
    %c0_6 = arith.constant 0 : index
    %6 = vector.load %arg3[%c0_5, %c0_6] : memref<128x128xf32, #tpu.memory_space<vmem>>, vector<128x128xf32>
    %c0_7 = arith.constant 0 : index
    %c0_8 = arith.constant 0 : index
    %7 = vector.load %arg6[%c0_7, %c0_8] : memref<128x128xf32, #tpu.memory_space<vmem>>, vector<128x128xf32>
    %cst_9 = arith.constant dense<0.000000e+00> : vector<128x128xf32>
    %8 = tpu.matmul %6, %7, %cst_9 {dimension_numbers = #tpu.dot_dimension_numbers<[1], [0], [0], [1], [0, 0, 1, 1], [], []>} : vector<128x128xf32>, vector<128x128xf32>, vector<128x128xf32> -> vector<128x128xf32>
    %c0_10 = arith.constant 0 : index
    %c0_11 = arith.constant 0 : index
    %9 = vector.load %arg7[%c0_10, %c0_11] : memref<1x128xf32, #tpu.memory_space<vmem>>, vector<1x128xf32>
    %10 = vector.broadcast %9 : vector<1x128xf32> to vector<128x128xf32>
    %11 = arith.addf %8, %10 : vector<128x128xf32>
    %cst_12 = arith.constant 0.000000e+00 : f32
    %12 = vector.broadcast %cst_12 : f32 to vector<128x128xf32>
    %13 = arith.cmpf ogt, %5, %12 : vector<128x128xf32>
    %14 = math.exp %5 : vector<128x128xf32>
    %cst_13 = arith.constant 1.000000e+00 : f32
    %15 = vector.broadcast %cst_13 : f32 to vector<128x128xf32>
    %16 = arith.subf %14, %15 : vector<128x128xf32>
    %17 = arith.select %13, %5, %16 : vector<128x128xi1>, vector<128x128xf32>
    %cst_14 = arith.constant 0.000000e+00 : f32
    %18 = vector.broadcast %cst_14 : f32 to vector<128x128xf32>
    %19 = arith.maximumf %11, %18 : vector<128x128xf32>
    %cst_15 = arith.constant 0.000000e+00 : f32
    %20 = vector.broadcast %cst_15 : f32 to vector<128x128xf32>
    %21 = arith.subf %20, %19 : vector<128x128xf32>
    %22 = math.exp %21 : vector<128x128xf32>
    %23 = arith.mulf %17, %22 : vector<128x128xf32>
    %c0_16 = arith.constant 0 : index
    %c0_17 = arith.constant 0 : index
    %24 = vector.load %arg8[%c0_16, %c0_17] : memref<128x128xf32, #tpu.memory_space<vmem>>, vector<128x128xf32>
    tpu.vector_store %arg8[%c0_16, %c0_17], %23 {strides = array<i32>} : memref<128x128xf32, #tpu.memory_space<vmem>>, vector<128x128xf32>,
    %25 = arith.mulf %19, %22 : vector<128x128xf32>
    %26 = arith.mulf %25, %22 : vector<128x128xf32>
    %c0_18 = arith.constant 0 : index
    %c0_19 = arith.constant 0 : index
    %27 = vector.load %arg9[%c0_18, %c0_19] : memref<128x128xf32, #tpu.memory_space<vmem>>, vector<128x128xf32>
    tpu.vector_store %arg9[%c0_18, %c0_19], %26 {strides = array<i32>} : memref<128x128xf32, #tpu.memory_space<vmem>>, vector<128x128xf32>,
    return
  }
  func.func @transform_0(%arg0: i32, %arg1: i32) -> (i32, i32) {
    %c0_i32 = arith.constant 0 : i32
    %c0_i32_0 = arith.constant 0 : i32
    return %arg0, %c0_i32 : i32, i32
  }
  func.func @transform_1(%arg0: i32, %arg1: i32) -> (i32, i32) {
    %c0_i32 = arith.constant 0 : i32
    %c0_i32_0 = arith.constant 0 : i32
    return %arg0, %c0_i32 : i32, i32
  }
  func.func @transform_2(%arg0: i32, %arg1: i32) -> (i32, i32) {
    %c0_i32 = arith.constant 0 : i32
    %c0_i32_0 = arith.constant 0 : i32
    return %c0_i32, %arg1 : i32, i32
  }
  func.func @transform_3(%arg0: i32, %arg1: i32) -> (i32, i32) {
    %c0_i32 = arith.constant 0 : i32
    %c0_i32_0 = arith.constant 0 : i32
    return %c0_i32, %arg1 : i32, i32
  }
  func.func @transform_4(%arg0: i32, %arg1: i32) -> (i32, i32) {
    %c0_i32 = arith.constant 0 : i32
    %c0_i32_0 = arith.constant 0 : i32
    return %c0_i32, %arg1 : i32, i32
  }
  func.func @transform_5(%arg0: i32, %arg1: i32) -> (i32, i32) {
    %c0_i32 = arith.constant 0 : i32
    %c0_i32_0 = arith.constant 0 : i32
    return %c0_i32, %arg1 : i32, i32
  }
  func.func @transform_6(%arg0: i32, %arg1: i32) -> (i32, i32) {
    %c0_i32 = arith.constant 0 : i32
    return %arg0, %arg1 : i32, i32
  }
  func.func @transform_7(%arg0: i32, %arg1: i32) -> (i32, i32) {
    %c0_i32 = arith.constant 0 : i32
    return %arg0, %arg1 : i32, i32
  }
}

</mosaic_0001>

<llo_original>
// kernel: tpu_custom_call.1
$region0: #{tpu_custom_call.1}
  #allocation0 [shape = 'u32[]', space=smem, size = 0x4, offset = 0x4, fixed_abs, tag = 'smem constant byte address 0x4 - core index']
  #allocation1 [shape = 'u32[72,128]{1,0:T(1,128)}', space=vmem, size = 0x9000, scoped, tag = 'internal scratch']
  %s0 = inlined_call_operand.hbm [shape: f32[128,128], index: 0, kind: input, shape index: {}]
  %s1 = inlined_call_operand.hbm [shape: f32[128,128], index: 1, kind: input, shape index: {}]
  %s2 = inlined_call_operand.hbm [shape: f32[128,128], index: 2, kind: input, shape index: {}]
  %s3 = inlined_call_operand.vmem [shape: f32[1,128], index: 3, kind: input, shape index: {}]
  %s4 = inlined_call_operand.hbm [shape: f32[128,128], index: 4, kind: input, shape index: {}]
  %s5 = inlined_call_operand.vmem [shape: f32[1,128], index: 5, kind: input, shape index: {}]
  %s6 = inlined_call_operand.hbm [shape: f32[128,128], index: 6, kind: output, shape index: {0}]
  %s7 = inlined_call_operand.hbm [shape: f32[128,128], index: 7, kind: output, shape index: {1}]
  %8 = xla_tuple %s6, %s7
  %s9 = sld [smem:[#allocation0]]
  $region58: #{tpu_custom_call.1} parent=0
    _
  %s11 = ssub.s32 1, %s9
  %s12 = scalar_select 0, %s11, %s9
  $region1: #{tpu_custom_call.1} parent=0
    #allocation2 [shape = 'u8[65536]{0}', space=vmem, size = 0x10000, scoped, tag = 'input window, operand 0, single buffered']
    #allocation3 [shape = 's32[1]{0}', space=sflag, size = 0x4, scoped, tag = 'scoped memory for tpu_custom_call.1']
    #allocation4 [shape = 's32[1]{0}', space=sflag, size = 0x4, scoped, tag = 'scoped memory for tpu_custom_call.1']
    #allocation5 [shape = 'u8[65536]{0}', space=vmem, size = 0x10000, scoped, tag = 'input window, operand 1, single buffered']
    #allocation6 [shape = 's32[1]{0}', space=sflag, size = 0x4, scoped, tag = 'scoped memory for tpu_custom_call.1']
    #allocation7 [shape = 'u8[65536]{0}', space=vmem, size = 0x10000, scoped, tag = 'input window, operand 2, single buffered']
    #allocation8 [shape = 'u8[65536]{0}', space=vmem, size = 0x10000, scoped, tag = 'input window, operand 4, single buffered']
    #allocation9 [shape = 's32[1]{0}', space=sflag, size = 0x4, scoped, tag = 'scoped memory for tpu_custom_call.1']
    #allocation10 [shape = 'u8[65536]{0}', space=vmem, size = 0x10000, scoped, tag = 'output window, operand 0, single buffered']
    #allocation11 [shape = 'u8[65536]{0}', space=vmem, size = 0x10000, scoped, tag = 'output window, operand 1, single buffered']
    #allocation12 [shape = 's32[1]{0}', space=sflag, size = 0x4, scoped, tag = 'scoped memory for tpu_custom_call.1']
    %13 = vsyncpa [#allocation3], 0
    %14 = vsyncpa [#allocation6], 0
    %15 = vsyncpa [#allocation9], 0
    %16 = vsyncpa [#allocation4], 0
    %17 = vsyncpa [#allocation12], 0
    // Predicated region
    $region2: #{tpu_custom_call.1} parent=1 // pred_check
      _
    $region3: #{tpu_custom_call.1} parent=1 // pred_check_branch
      %19 = sbr.rel (0) target = $region5
    $region4: #{tpu_custom_call.1} parent=1 // pred_region
      %21 = vsyncadd [#allocation3], 0
      %s22 = sshll.u32 %s0, 4
      %s23 = int_to_ptr.hbm [resolvable:$true] %s22
      %s24 = sshll.u32 [#allocation2], 4
      %s25 = int_to_ptr.vmem [resolvable:$true] %s24
      %30 = dma.hbm_to_vmem [thread:$0]  %s23, 2048, %s25, [#allocation3], 128, 128, 8
    $region5: #{tpu_custom_call.1} parent=1 // pred_fallthru
      _
    // Predicated region
    $region6: #{tpu_custom_call.1} parent=1 // pred_check
      _
    $region7: #{tpu_custom_call.1} parent=1 // pred_check_branch
      %32 = sbr.rel (0) target = $region9
    $region8: #{tpu_custom_call.1} parent=1 // pred_region
      %34 = vsyncadd [#allocation6], 0
      %s35 = sshll.u32 %s1, 4
      %s36 = int_to_ptr.hbm [resolvable:$true] %s35
      %s37 = sshll.u32 [#allocation5], 4
      %s38 = int_to_ptr.vmem [resolvable:$true] %s37
      %43 = dma.hbm_to_vmem [thread:$0]  %s36, 2048, %s38, [#allocation6], 128, 128, 8
    $region9: #{tpu_custom_call.1} parent=1 // pred_fallthru
      _
    // Predicated region
    $region10: #{tpu_custom_call.1} parent=1 // pred_check
      _
    $region11: #{tpu_custom_call.1} parent=1 // pred_check_branch
      %45 = sbr.rel (0) target = $region13
    $region12: #{tpu_custom_call.1} parent=1 // pred_region
      %47 = vsyncadd [#allocation6], 0
      %s48 = sshll.u32 %s2, 4
      %s49 = int_to_ptr.hbm [resolvable:$true] %s48
      %s50 = sshll.u32 [#allocation7], 4
      %s51 = int_to_ptr.vmem [resolvable:$true] %s50
      %56 = dma.hbm_to_vmem [thread:$0]  %s49, 2048, %s51, [#allocation6], 128, 128, 8
    $region13: #{tpu_custom_call.1} parent=1 // pred_fallthru
      _
    // Predicated region
    $region14: #{tpu_custom_call.1} parent=1 // pred_check
      _
    $region15: #{tpu_custom_call.1} parent=1 // pred_check_branch
      %58 = sbr.rel (0) target = $region17
    $region16: #{tpu_custom_call.1} parent=1 // pred_region
      _
    $region17: #{tpu_custom_call.1} parent=1 // pred_fallthru
      _
    // Predicated region
    $region18: #{tpu_custom_call.1} parent=1 // pred_check
      _
    $region19: #{tpu_custom_call.1} parent=1 // pred_check_branch
      %60 = sbr.rel (0) target = $region21
    $region20: #{tpu_custom_call.1} parent=1 // pred_region
      %62 = vsyncadd [#allocation9], 0
      %s63 = sshll.u32 %s4, 4
      %s64 = int_to_ptr.hbm [resolvable:$true] %s63
      %s65 = sshll.u32 [#allocation8], 4
      %s66 = int_to_ptr.vmem [resolvable:$true] %s65
      %71 = dma.hbm_to_vmem [thread:$0]  %s64, 2048, %s66, [#allocation9], 128, 128, 8
    $region21: #{tpu_custom_call.1} parent=1 // pred_fallthru
      _
    // Predicated region
    $region22: #{tpu_custom_call.1} parent=1 // pred_check
      _
    $region23: #{tpu_custom_call.1} parent=1 // pred_check_branch
      %73 = sbr.rel (0) target = $region25
    $region24: #{tpu_custom_call.1} parent=1 // pred_region
      _
    $region25: #{tpu_custom_call.1} parent=1 // pred_fallthru
      _
    // Predicated region
    $region26: #{tpu_custom_call.1} parent=1 // pred_check
      _
    $region27: #{tpu_custom_call.1} parent=1 // pred_check_branch
      %75 = sbr.rel (0) target = $region29
    $region28: #{tpu_custom_call.1} parent=1 // pred_region
      %77 = dma.done [#allocation3], 2048
    $region29: #{tpu_custom_call.1} parent=1 // pred_fallthru
      _
    // Predicated region
    $region30: #{tpu_custom_call.1} parent=1 // pred_check
      _
    $region31: #{tpu_custom_call.1} parent=1 // pred_check_branch
      %79 = sbr.rel (0) target = $region33
    $region32: #{tpu_custom_call.1} parent=1 // pred_region
      %81 = dma.done [#allocation6], 2048
    $region33: #{tpu_custom_call.1} parent=1 // pred_fallthru
      _
    // Predicated region
    $region34: #{tpu_custom_call.1} parent=1 // pred_check
      _
    $region35: #{tpu_custom_call.1} parent=1 // pred_check_branch
      %83 = sbr.rel (0) target = $region37
    $region36: #{tpu_custom_call.1} parent=1 // pred_region
      %85 = dma.done [#allocation6], 2048
    $region37: #{tpu_custom_call.1} parent=1 // pred_fallthru
      _
    // Predicated region
    $region38: #{tpu_custom_call.1} parent=1 // pred_check
      _
    $region39: #{tpu_custom_call.1} parent=1 // pred_check_branch
      %87 = sbr.rel (0) target = $region41
    $region40: #{tpu_custom_call.1} parent=1 // pred_region
      %89 = dma.done [#allocation9], 2048
    $region41: #{tpu_custom_call.1} parent=1 // pred_fallthru
      _
    %v90 = vld [vmem:[#allocation2] sm:$0xff]
    %v91 = vld [vmem:[#allocation2 + $0x8] sm:$0xff]
    %v92 = vld [vmem:[#allocation2 + $0x10] sm:$0xff]
    %v93 = vld [vmem:[#allocation2 + $0x18] sm:$0xff]
    %v94 = vld [vmem:[#allocation2 + $0x20] sm:$0xff]
    %v95 = vld [vmem:[#allocation2 + $0x28] sm:$0xff]
    %v96 = vld [vmem:[#allocation2 + $0x30] sm:$0xff]
    %v97 = vld [vmem:[#allocation2 + $0x38] sm:$0xff]
    %v98 = vld [vmem:[#allocation2 + $0x40] sm:$0xff]
    %v99 = vld [vmem:[#allocation2 + $0x48] sm:$0xff]
    %v100 = vld [vmem:[#allocation2 + $0x50] sm:$0xff]
    %v101 = vld [vmem:[#allocation2 + $0x58] sm:$0xff]
    %v102 = vld [vmem:[#allocation2 + $0x60] sm:$0xff]
    %v103 = vld [vmem:[#allocation2 + $0x68] sm:$0xff]
    %v104 = vld [vmem:[#allocation2 + $0x70] sm:$0xff]
    %v105 = vld [vmem:[#allocation2 + $0x78] sm:$0xff]
    %v106 = vld [vmem:[#allocation7] sm:$0xff]
    %v107 = vld [vmem:[#allocation7 + $0x8] sm:$0xff]
    %v108 = vld [vmem:[#allocation7 + $0x10] sm:$0xff]
    %v109 = vld [vmem:[#allocation7 + $0x18] sm:$0xff]
    %v110 = vld [vmem:[#allocation7 + $0x20] sm:$0xff]
    %v111 = vld [vmem:[#allocation7 + $0x28] sm:$0xff]
    %v112 = vld [vmem:[#allocation7 + $0x30] sm:$0xff]
    %v113 = vld [vmem:[#allocation7 + $0x38] sm:$0xff]
    %v114 = vld [vmem:[#allocation7 + $0x40] sm:$0xff]
    %v115 = vld [vmem:[#allocation7 + $0x48] sm:$0xff]
    %v116 = vld [vmem:[#allocation7 + $0x50] sm:$0xff]
    %v117 = vld [vmem:[#allocation7 + $0x58] sm:$0xff]
    %v118 = vld [vmem:[#allocation7 + $0x60] sm:$0xff]
    %v119 = vld [vmem:[#allocation7 + $0x68] sm:$0xff]
    %v120 = vld [vmem:[#allocation7 + $0x70] sm:$0xff]
    %v121 = vld [vmem:[#allocation7 + $0x78] sm:$0xff]
    %v122 = vld [vmem:[%s3] sm:$0x1]
    %v124 = vperm.slane %v122, 0
    %126 = vmatpush.msra.mxu0 %v121
    %127 = vmatpush.msra.mxu0 %v120
    %128 = vmatpush.msra.mxu0 %v119
    %129 = vmatpush.msra.mxu0 %v118
    %130 = vmatpush.msra.mxu0 %v117
    %131 = vmatpush.msra.mxu0 %v116
    %132 = vmatpush.msra.mxu0 %v115
    %133 = vmatpush.msra.mxu0 %v114
    %134 = vmatpush.msra.mxu0 %v113
    %135 = vmatpush.msra.mxu0 %v112
    %136 = vmatpush.msra.mxu0 %v111
    %137 = vmatpush.msra.mxu0 %v110
    %138 = vmatpush.msra.mxu0 %v109
    %139 = vmatpush.msra.mxu0 %v108
    %140 = vmatpush.msra.mxu0 %v107
    %141 = vmatpush.msra.mxu0 %v106
    %142 = vmatmul.f32.gmra.mxu0 %v90
    %v143 = vpop.f32.mrf.mxu0
    %v144 = vadd.f32 %v124, %v143
    %145 = vmatmul.f32.gmra.mxu0 %v91
    %v146 = vpop.f32.mrf.mxu0
    %v147 = vadd.f32 %v124, %v146
    %148 = vmatmul.f32.gmra.mxu0 %v92
    %v149 = vpop.f32.mrf.mxu0
    %v150 = vadd.f32 %v124, %v149
    %151 = vmatmul.f32.gmra.mxu0 %v93
    %v152 = vpop.f32.mrf.mxu0
    %v153 = vadd.f32 %v124, %v152
    %154 = vmatmul.f32.gmra.mxu0 %v94
    %v155 = vpop.f32.mrf.mxu0
    %v156 = vadd.f32 %v124, %v155
    %157 = vmatmul.f32.gmra.mxu0 %v95
    %v158 = vpop.f32.mrf.mxu0
    %v159 = vadd.f32 %v124, %v158
    %160 = vmatmul.f32.gmra.mxu0 %v96
    %v161 = vpop.f32.mrf.mxu0
    %v162 = vadd.f32 %v124, %v161
    %163 = vmatmul.f32.gmra.mxu0 %v97
    %v164 = vpop.f32.mrf.mxu0
    %v165 = vadd.f32 %v124, %v164
    %166 = vmatmul.f32.gmra.mxu0 %v98
    %v167 = vpop.f32.mrf.mxu0
    %v168 = vadd.f32 %v124, %v167
    %169 = vmatmul.f32.gmra.mxu0 %v99
    %v170 = vpop.f32.mrf.mxu0
    %v171 = vadd.f32 %v124, %v170
    %172 = vmatmul.f32.gmra.mxu0 %v100
    %v173 = vpop.f32.mrf.mxu0
    %v174 = vadd.f32 %v124, %v173
    %175 = vmatmul.f32.gmra.mxu0 %v101
    %v176 = vpop.f32.mrf.mxu0
    %v177 = vadd.f32 %v124, %v176
    %178 = vmatmul.f32.gmra.mxu0 %v102
    %v179 = vpop.f32.mrf.mxu0
    %v180 = vadd.f32 %v124, %v179
    %181 = vmatmul.f32.gmra.mxu0 %v103
    %v182 = vpop.f32.mrf.mxu0
    %v183 = vadd.f32 %v124, %v182
    %184 = vmatmul.f32.gmra.mxu0 %v104
    %v185 = vpop.f32.mrf.mxu0
    %v186 = vadd.f32 %v124, %v185
    %187 = vmatmul.f32.gmra.mxu0 %v105
    %v188 = vpop.f32.mrf.mxu0
    %v189 = vadd.f32 %v124, %v188
    %190 = vdwg.mxu0
    %v191 = vld [vmem:[#allocation5] sm:$0xff]
    %v192 = vld [vmem:[#allocation5 + $0x8] sm:$0xff]
    %v193 = vld [vmem:[#allocation5 + $0x10] sm:$0xff]
    %v194 = vld [vmem:[#allocation5 + $0x18] sm:$0xff]
    %v195 = vld [vmem:[#allocation5 + $0x20] sm:$0xff]
    %v196 = vld [vmem:[#allocation5 + $0x28] sm:$0xff]
    %v197 = vld [vmem:[#allocation5 + $0x30] sm:$0xff]
    %v198 = vld [vmem:[#allocation5 + $0x38] sm:$0xff]
    %v199 = vld [vmem:[#allocation5 + $0x40] sm:$0xff]
    %v200 = vld [vmem:[#allocation5 + $0x48] sm:$0xff]
    %v201 = vld [vmem:[#allocation5 + $0x50] sm:$0xff]
    %v202 = vld [vmem:[#allocation5 + $0x58] sm:$0xff]
    %v203 = vld [vmem:[#allocation5 + $0x60] sm:$0xff]
    %v204 = vld [vmem:[#allocation5 + $0x68] sm:$0xff]
    %v205 = vld [vmem:[#allocation5 + $0x70] sm:$0xff]
    %v206 = vld [vmem:[#allocation5 + $0x78] sm:$0xff]
    %v207 = vld [vmem:[#allocation8] sm:$0xff]
    %v208 = vld [vmem:[#allocation8 + $0x8] sm:$0xff]
    %v209 = vld [vmem:[#allocation8 + $0x10] sm:$0xff]
    %v210 = vld [vmem:[#allocation8 + $0x18] sm:$0xff]
    %v211 = vld [vmem:[#allocation8 + $0x20] sm:$0xff]
    %v212 = vld [vmem:[#allocation8 + $0x28] sm:$0xff]
    %v213 = vld [vmem:[#allocation8 + $0x30] sm:$0xff]
    %v214 = vld [vmem:[#allocation8 + $0x38] sm:$0xff]
    %v215 = vld [vmem:[#allocation8 + $0x40] sm:$0xff]
    %v216 = vld [vmem:[#allocation8 + $0x48] sm:$0xff]
    %v217 = vld [vmem:[#allocation8 + $0x50] sm:$0xff]
    %v218 = vld [vmem:[#allocation8 + $0x58] sm:$0xff]
    %v219 = vld [vmem:[#allocation8 + $0x60] sm:$0xff]
    %v220 = vld [vmem:[#allocation8 + $0x68] sm:$0xff]
    %v221 = vld [vmem:[#allocation8 + $0x70] sm:$0xff]
    %v222 = vld [vmem:[#allocation8 + $0x78] sm:$0xff]
    %v223 = vld [vmem:[%s5] sm:$0x1]
    %v225 = vperm.slane %v223, 0
    %227 = vmatpush.msra.mxu0 %v222
    %228 = vmatpush.msra.mxu0 %v221
    %229 = vmatpush.msra.mxu0 %v220
    %230 = vmatpush.msra.mxu0 %v219
    %231 = vmatpush.msra.mxu0 %v218
    %232 = vmatpush.msra.mxu0 %v217
    %233 = vmatpush.msra.mxu0 %v216
    %234 = vmatpush.msra.mxu0 %v215
    %235 = vmatpush.msra.mxu0 %v214
    %236 = vmatpush.msra.mxu0 %v213
    %237 = vmatpush.msra.mxu0 %v212
    %238 = vmatpush.msra.mxu0 %v211
    %239 = vmatpush.msra.mxu0 %v210
    %240 = vmatpush.msra.mxu0 %v209
    %241 = vmatpush.msra.mxu0 %v208
    %242 = vmatpush.msra.mxu0 %v207
    %243 = vmatmul.f32.gmra.mxu0 %v191
    %v244 = vpop.f32.mrf.mxu0
    %v245 = vadd.f32 %v225, %v244
    %246 = vmatmul.f32.gmra.mxu0 %v192
    %v247 = vpop.f32.mrf.mxu0
    %v248 = vadd.f32 %v225, %v247
    %249 = vmatmul.f32.gmra.mxu0 %v193
    %v250 = vpop.f32.mrf.mxu0
    %v251 = vadd.f32 %v225, %v250
    %252 = vmatmul.f32.gmra.mxu0 %v194
    %v253 = vpop.f32.mrf.mxu0
    %v254 = vadd.f32 %v225, %v253
    %255 = vmatmul.f32.gmra.mxu0 %v195
    %v256 = vpop.f32.mrf.mxu0
    %v257 = vadd.f32 %v225, %v256
    %258 = vmatmul.f32.gmra.mxu0 %v196
    %v259 = vpop.f32.mrf.mxu0
    %v260 = vadd.f32 %v225, %v259
    %261 = vmatmul.f32.gmra.mxu0 %v197
    %v262 = vpop.f32.mrf.mxu0
    %v263 = vadd.f32 %v225, %v262
    %264 = vmatmul.f32.gmra.mxu0 %v198
    %v265 = vpop.f32.mrf.mxu0
    %v266 = vadd.f32 %v225, %v265
    %267 = vmatmul.f32.gmra.mxu0 %v199
    %v268 = vpop.f32.mrf.mxu0
    %v269 = vadd.f32 %v225, %v268
    %270 = vmatmul.f32.gmra.mxu0 %v200
    %v271 = vpop.f32.mrf.mxu0
    %v272 = vadd.f32 %v225, %v271
    %273 = vmatmul.f32.gmra.mxu0 %v201
    %v274 = vpop.f32.mrf.mxu0
    %v275 = vadd.f32 %v225, %v274
    %276 = vmatmul.f32.gmra.mxu0 %v202
    %v277 = vpop.f32.mrf.mxu0
    %v278 = vadd.f32 %v225, %v277
    %279 = vmatmul.f32.gmra.mxu0 %v203
    %v280 = vpop.f32.mrf.mxu0
    %v281 = vadd.f32 %v225, %v280
    %282 = vmatmul.f32.gmra.mxu0 %v204
    %v283 = vpop.f32.mrf.mxu0
    %v284 = vadd.f32 %v225, %v283
    %285 = vmatmul.f32.gmra.mxu0 %v205
    %v286 = vpop.f32.mrf.mxu0
    %v287 = vadd.f32 %v225, %v286
    %288 = vmatmul.f32.gmra.mxu0 %v206
    %v289 = vpop.f32.mrf.mxu0
    %v290 = vadd.f32 %v225, %v289
    %291 = vdwg.mxu0
    %vm292 = vcmp.gt.f32.partialorder %v144, 0.0
    %vm293 = vcmp.gt.f32.partialorder %v147, 0.0
    %vm294 = vcmp.gt.f32.partialorder %v150, 0.0
    %vm295 = vcmp.gt.f32.partialorder %v153, 0.0
    %vm296 = vcmp.gt.f32.partialorder %v156, 0.0
    %vm297 = vcmp.gt.f32.partialorder %v159, 0.0
    %vm298 = vcmp.gt.f32.partialorder %v162, 0.0
    %vm299 = vcmp.gt.f32.partialorder %v165, 0.0
    %vm300 = vcmp.gt.f32.partialorder %v168, 0.0
    %vm301 = vcmp.gt.f32.partialorder %v171, 0.0
    %vm302 = vcmp.gt.f32.partialorder %v174, 0.0
    %vm303 = vcmp.gt.f32.partialorder %v177, 0.0
    %vm304 = vcmp.gt.f32.partialorder %v180, 0.0
    %vm305 = vcmp.gt.f32.partialorder %v183, 0.0
    %vm306 = vcmp.gt.f32.partialorder %v186, 0.0
    %vm307 = vcmp.gt.f32.partialorder %v189, 0.0
    %v308 = vmul.f32 %v144, 1.442695
    %v309 = vpow.pop %v308
    %v310 = vmul.f32 %v147, 1.442695
    %v311 = vpow.pop %v310
    %v312 = vmul.f32 %v150, 1.442695
    %v313 = vpow.pop %v312
    %v314 = vmul.f32 %v153, 1.442695
    %v315 = vpow.pop %v314
    %v316 = vmul.f32 %v156, 1.442695
    %v317 = vpow.pop %v316
    %v318 = vmul.f32 %v159, 1.442695
    %v319 = vpow.pop %v318
    %v320 = vmul.f32 %v162, 1.442695
    %v321 = vpow.pop %v320
    %v322 = vmul.f32 %v165, 1.442695
    %v323 = vpow.pop %v322
    %v324 = vmul.f32 %v168, 1.442695
    %v325 = vpow.pop %v324
    %v326 = vmul.f32 %v171, 1.442695
    %v327 = vpow.pop %v326
    %v328 = vmul.f32 %v174, 1.442695
    %v329 = vpow.pop %v328
    %v330 = vmul.f32 %v177, 1.442695
    %v331 = vpow.pop %v330
    %v332 = vmul.f32 %v180, 1.442695
    %v333 = vpow.pop %v332
    %v334 = vmul.f32 %v183, 1.442695
    %v335 = vpow.pop %v334
    %v336 = vmul.f32 %v186, 1.442695
    %v337 = vpow.pop %v336
    %v338 = vmul.f32 %v189, 1.442695
    %v339 = vpow.pop %v338
    %v340 = vsub.f32 %v309, 1.0
    %v341 = vsub.f32 %v311, 1.0
    %v342 = vsub.f32 %v313, 1.0
    %v343 = vsub.f32 %v315, 1.0
    %v344 = vsub.f32 %v317, 1.0
    %v345 = vsub.f32 %v319, 1.0
    %v346 = vsub.f32 %v321, 1.0
    %v347 = vsub.f32 %v323, 1.0
    %v348 = vsub.f32 %v325, 1.0
    %v349 = vsub.f32 %v327, 1.0
    %v350 = vsub.f32 %v329, 1.0
    %v351 = vsub.f32 %v331, 1.0
    %v352 = vsub.f32 %v333, 1.0
    %v353 = vsub.f32 %v335, 1.0
    %v354 = vsub.f32 %v337, 1.0
    %v355 = vsub.f32 %v339, 1.0
    %v356 = vsel %vm292, %v144, %v340
    %v357 = vsel %vm293, %v147, %v341
    %v358 = vsel %vm294, %v150, %v342
    %v359 = vsel %vm295, %v153, %v343
    %v360 = vsel %vm296, %v156, %v344
    %v361 = vsel %vm297, %v159, %v345
    %v362 = vsel %vm298, %v162, %v346
    %v363 = vsel %vm299, %v165, %v347
    %v364 = vsel %vm300, %v168, %v348
    %v365 = vsel %vm301, %v171, %v349
    %v366 = vsel %vm302, %v174, %v350
    %v367 = vsel %vm303, %v177, %v351
    %v368 = vsel %vm304, %v180, %v352
    %v369 = vsel %vm305, %v183, %v353
    %v370 = vsel %vm306, %v186, %v354
    %v371 = vsel %vm307, %v189, %v355
    %v372 = vmax.f32 %v245, 0.0
    %v373 = vmax.f32 %v248, 0.0
    %v374 = vmax.f32 %v251, 0.0
    %v375 = vmax.f32 %v254, 0.0
    %v376 = vmax.f32 %v257, 0.0
    %v377 = vmax.f32 %v260, 0.0
    %v378 = vmax.f32 %v263, 0.0
    %v379 = vmax.f32 %v266, 0.0
    %v380 = vmax.f32 %v269, 0.0
    %v381 = vmax.f32 %v272, 0.0
    %v382 = vmax.f32 %v275, 0.0
    %v383 = vmax.f32 %v278, 0.0
    %v384 = vmax.f32 %v281, 0.0
    %v385 = vmax.f32 %v284, 0.0
    %v386 = vmax.f32 %v287, 0.0
    %v387 = vmax.f32 %v290, 0.0
    %v388 = vsub.f32 0.0, %v372
    %v389 = vsub.f32 0.0, %v373
    %v390 = vsub.f32 0.0, %v374
    %v391 = vsub.f32 0.0, %v375
    %v392 = vsub.f32 0.0, %v376
    %v393 = vsub.f32 0.0, %v377
    %v394 = vsub.f32 0.0, %v378
    %v395 = vsub.f32 0.0, %v379
    %v396 = vsub.f32 0.0, %v380
    %v397 = vsub.f32 0.0, %v381
    %v398 = vsub.f32 0.0, %v382
    %v399 = vsub.f32 0.0, %v383
    %v400 = vsub.f32 0.0, %v384
    %v401 = vsub.f32 0.0, %v385
    %v402 = vsub.f32 0.0, %v386
    %v403 = vsub.f32 0.0, %v387
    %v404 = vmul.f32 %v388, 1.442695
    %v405 = vpow.pop %v404
    %v406 = vmul.f32 %v389, 1.442695
    %v407 = vpow.pop %v406
    %v408 = vmul.f32 %v390, 1.442695
    %v409 = vpow.pop %v408
    %v410 = vmul.f32 %v391, 1.442695
    %v411 = vpow.pop %v410
    %v412 = vmul.f32 %v392, 1.442695
    %v413 = vpow.pop %v412
    %v414 = vmul.f32 %v393, 1.442695
    %v415 = vpow.pop %v414
    %v416 = vmul.f32 %v394, 1.442695
    %v417 = vpow.pop %v416
    %v418 = vmul.f32 %v395, 1.442695
    %v419 = vpow.pop %v418
    %v420 = vmul.f32 %v396, 1.442695
    %v421 = vpow.pop %v420
    %v422 = vmul.f32 %v397, 1.442695
    %v423 = vpow.pop %v422
    %v424 = vmul.f32 %v398, 1.442695
    %v425 = vpow.pop %v424
    %v426 = vmul.f32 %v399, 1.442695
    %v427 = vpow.pop %v426
    %v428 = vmul.f32 %v400, 1.442695
    %v429 = vpow.pop %v428
    %v430 = vmul.f32 %v401, 1.442695
    %v431 = vpow.pop %v430
    %v432 = vmul.f32 %v402, 1.442695
    %v433 = vpow.pop %v432
    %v434 = vmul.f32 %v403, 1.442695
    %v435 = vpow.pop %v434
    %v436 = vmul.f32 %v356, %v405
    %v437 = vmul.f32 %v357, %v407
    %v438 = vmul.f32 %v358, %v409
    %v439 = vmul.f32 %v359, %v411
    %v440 = vmul.f32 %v360, %v413
    %v441 = vmul.f32 %v361, %v415
    %v442 = vmul.f32 %v362, %v417
    %v443 = vmul.f32 %v363, %v419
    %v444 = vmul.f32 %v364, %v421
    %v445 = vmul.f32 %v365, %v423
    %v446 = vmul.f32 %v366, %v425
    %v447 = vmul.f32 %v367, %v427
    %v448 = vmul.f32 %v368, %v429
    %v449 = vmul.f32 %v369, %v431
    %v450 = vmul.f32 %v370, %v433
    %v451 = vmul.f32 %v371, %v435
    %452 = vst [vmem:[#allocation10] sm:$0xff] %v436
    %453 = vst [vmem:[#allocation10 + $0x8] sm:$0xff] %v437
    %454 = vst [vmem:[#allocation10 + $0x10] sm:$0xff] %v438
    %455 = vst [vmem:[#allocation10 + $0x18] sm:$0xff] %v439
    %456 = vst [vmem:[#allocation10 + $0x20] sm:$0xff] %v440
    %457 = vst [vmem:[#allocation10 + $0x28] sm:$0xff] %v441
    %458 = vst [vmem:[#allocation10 + $0x30] sm:$0xff] %v442
    %459 = vst [vmem:[#allocation10 + $0x38] sm:$0xff] %v443
    %460 = vst [vmem:[#allocation10 + $0x40] sm:$0xff] %v444
    %461 = vst [vmem:[#allocation10 + $0x48] sm:$0xff] %v445
    %462 = vst [vmem:[#allocation10 + $0x50] sm:$0xff] %v446
    %463 = vst [vmem:[#allocation10 + $0x58] sm:$0xff] %v447
    %464 = vst [vmem:[#allocation10 + $0x60] sm:$0xff] %v448
    %465 = vst [vmem:[#allocation10 + $0x68] sm:$0xff] %v449
    %466 = vst [vmem:[#allocation10 + $0x70] sm:$0xff] %v450
    %467 = vst [vmem:[#allocation10 + $0x78] sm:$0xff] %v451
    %v468 = vmul.f32 %v372, %v405
    %v469 = vmul.f32 %v373, %v407
    %v470 = vmul.f32 %v374, %v409
    %v471 = vmul.f32 %v375, %v411
    %v472 = vmul.f32 %v376, %v413
    %v473 = vmul.f32 %v377, %v415
    %v474 = vmul.f32 %v378, %v417
    %v475 = vmul.f32 %v379, %v419
    %v476 = vmul.f32 %v380, %v421
    %v477 = vmul.f32 %v381, %v423
    %v478 = vmul.f32 %v382, %v425
    %v479 = vmul.f32 %v383, %v427
    %v480 = vmul.f32 %v384, %v429
    %v481 = vmul.f32 %v385, %v431
    %v482 = vmul.f32 %v386, %v433
    %v483 = vmul.f32 %v387, %v435
    %v484 = vmul.f32 %v468, %v405
    %v485 = vmul.f32 %v469, %v407
    %v486 = vmul.f32 %v470, %v409
    %v487 = vmul.f32 %v471, %v411
    %v488 = vmul.f32 %v472, %v413
    %v489 = vmul.f32 %v473, %v415
    %v490 = vmul.f32 %v474, %v417
    %v491 = vmul.f32 %v475, %v419
    %v492 = vmul.f32 %v476, %v421
    %v493 = vmul.f32 %v477, %v423
    %v494 = vmul.f32 %v478, %v425
    %v495 = vmul.f32 %v479, %v427
    %v496 = vmul.f32 %v480, %v429
    %v497 = vmul.f32 %v481, %v431
    %v498 = vmul.f32 %v482, %v433
    %v499 = vmul.f32 %v483, %v435
    %500 = vst [vmem:[#allocation11] sm:$0xff] %v484
    %501 = vst [vmem:[#allocation11 + $0x8] sm:$0xff] %v485
    %502 = vst [vmem:[#allocation11 + $0x10] sm:$0xff] %v486
    %503 = vst [vmem:[#allocation11 + $0x18] sm:$0xff] %v487
    %504 = vst [vmem:[#allocation11 + $0x20] sm:$0xff] %v488
    %505 = vst [vmem:[#allocation11 + $0x28] sm:$0xff] %v489
    %506 = vst [vmem:[#allocation11 + $0x30] sm:$0xff] %v490
    %507 = vst [vmem:[#allocation11 + $0x38] sm:$0xff] %v491
    %508 = vst [vmem:[#allocation11 + $0x40] sm:$0xff] %v492
    %509 = vst [vmem:[#allocation11 + $0x48] sm:$0xff] %v493
    %510 = vst [vmem:[#allocation11 + $0x50] sm:$0xff] %v494
    %511 = vst [vmem:[#allocation11 + $0x58] sm:$0xff] %v495
    %512 = vst [vmem:[#allocation11 + $0x60] sm:$0xff] %v496
    %513 = vst [vmem:[#allocation11 + $0x68] sm:$0xff] %v497
    %514 = vst [vmem:[#allocation11 + $0x70] sm:$0xff] %v498
    %515 = vst [vmem:[#allocation11 + $0x78] sm:$0xff] %v499
    // Predicated region
    $region42: #{tpu_custom_call.1} parent=1 // pred_check
      _
    $region43: #{tpu_custom_call.1} parent=1 // pred_check_branch
      %517 = sbr.rel (0) target = $region45
    $region44: #{tpu_custom_call.1} parent=1 // pred_region
      %519 = vsyncadd [#allocation4], 0
      %s520 = sshll.u32 [#allocation10], 4
      %s521 = int_to_ptr.vmem [resolvable:$true] %s520
      %s522 = sshll.u32 %s6, 4
      %s523 = int_to_ptr.hbm [resolvable:$true] %s522
      %528 = dma.vmem_to_hbm [thread:$0]  %s521, 2048, %s523, [#allocation4], 128, 128, 8
    $region45: #{tpu_custom_call.1} parent=1 // pred_fallthru
      _
    // Predicated region
    $region46: #{tpu_custom_call.1} parent=1 // pred_check
      _
    $region47: #{tpu_custom_call.1} parent=1 // pred_check_branch
      %530 = sbr.rel (0) target = $region49
    $region48: #{tpu_custom_call.1} parent=1 // pred_region
      %532 = vsyncadd [#allocation12], 0
      %s533 = sshll.u32 [#allocation11], 4
      %s534 = int_to_ptr.vmem [resolvable:$true] %s533
      %s535 = sshll.u32 %s7, 4
      %s536 = int_to_ptr.hbm [resolvable:$true] %s535
      %541 = dma.vmem_to_hbm [thread:$0]  %s534, 2048, %s536, [#allocation12], 128, 128, 8
    $region49: #{tpu_custom_call.1} parent=1 // pred_fallthru
      _
    // Predicated region
    $region50: #{tpu_custom_call.1} parent=1 // pred_check
      _
    $region51: #{tpu_custom_call.1} parent=1 // pred_check_branch
      %543 = sbr.rel (0) target = $region53
    $region52: #{tpu_custom_call.1} parent=1 // pred_region
      %545 = dma.done [#allocation4], 2048
    $region53: #{tpu_custom_call.1} parent=1 // pred_fallthru
      _
    // Predicated region
    $region54: #{tpu_custom_call.1} parent=1 // pred_check
      _
    $region55: #{tpu_custom_call.1} parent=1 // pred_check_branch
      %547 = sbr.rel (0) target = $region57
    $region56: #{tpu_custom_call.1} parent=1 // pred_region
      %549 = dma.done [#allocation12], 2048
    $region57: #{tpu_custom_call.1} parent=1 // pred_fallthru
      _
    %550 = vsyncpa [#allocation3], 1
    %551 = vsyncpa [#allocation6], 1
    %552 = vsyncpa [#allocation9], 1
    %553 = vsyncpa [#allocation4], 1
    %554 = vsyncpa [#allocation12], 1

</llo_original>
